<compile_context>
chip_gen: v7x
topology: tpu7x:2x2x1
jax: 0.10.0
libtpu: 0.0.40
codegen_flags: <defaults>
</compile_context>

<pallas_src>
import jax
import jax.numpy as jnp
from jax.experimental import pallas as pl
from jax.experimental.pallas import tpu as pltpu

LANE_WIDTH = 1024      # last dim of the 2D slab; large multiple of 128 (lane-dense)
MAX_TILE_ROWS = 512    # (512, 1024) f32 block = 2 MiB; x2 arrays x2 buffers = 8 MiB VMEM


def _sigmoid_kernel(x_ref, o_ref):
    # Upcast to f32 for the transcendental (free on v5e where VPU/EUP have no
    # bf16 anyway), compute sigmoid via tanh (avoids inf intermediates), cast
    # back to the storage dtype on the way out.
    x = x_ref[...].astype(jnp.float32)
    y = 0.5 * jnp.tanh(0.5 * x) + 0.5
    o_ref[...] = y.astype(o_ref.dtype)


def _sublane_multiple(dtype) -> int:
    itemsize = jnp.dtype(dtype).itemsize
    if itemsize == 2:
        return 16   # bf16/f16 pack 2 rows per sublane
    if itemsize == 1:
        return 32   # int8/fp8 pack 4 rows per sublane
    return 8


def sigmoid_forward(s: jax.Array) -> jax.Array:
    """Elementwise sigmoid via a Pallas TPU kernel. Works for any shape/rank."""
    orig_shape = s.shape
    orig_dtype = s.dtype

    flat = s.reshape(-1)
    n = flat.shape[0]
    if n == 0:
        return s

    # Pad only up to a multiple of the slab width (NOT a full tile).
    n_pad = ((n + LANE_WIDTH - 1) // LANE_WIDTH) * LANE_WIDTH
    padded = n_pad != n
    if padded:
        flat = jnp.pad(flat, (0, n_pad - n))

    rows = n_pad // LANE_WIDTH
    x2d = flat.reshape(rows, LANE_WIDTH)

    # Block row count: big (up to 512) but never absurdly larger than the
    # array; always a multiple of the dtype's sublane packing factor.
    sub = _sublane_multiple(orig_dtype)
    tile_rows = min(MAX_TILE_ROWS, ((rows + sub - 1) // sub) * sub)

    grid = (pl.cdiv(rows, tile_rows),)  # ragged last block handled by Pallas

    out2d = pl.pallas_call(
        _sigmoid_kernel,
        out_shape=jax.ShapeDtypeStruct((rows, LANE_WIDTH), orig_dtype),
        grid=grid,
        in_specs=[pl.BlockSpec((tile_rows, LANE_WIDTH), lambda i: (i, 0))],
        out_specs=pl.BlockSpec((tile_rows, LANE_WIDTH), lambda i: (i, 0)),
        compiler_params=pltpu.CompilerParams(
            dimension_semantics=("parallel",),
        ),
    )(x2d)

    out_flat = out2d.reshape(-1)
    if padded:
        out_flat = out_flat[:n]
    return out_flat.reshape(orig_shape)


if __name__ == "__main__":
    key = jax.random.PRNGKey(0)

    # Small NCHW-like input, consistent with typical use of this activation.
    x = jax.random.normal(key, (2, 4, 16, 16), dtype=jnp.float32)
    y = jax.block_until_ready(sigmoid_forward(x))
    y_ref = 1.0 / (1.0 + jnp.exp(-x))
    assert y.shape == x.shape and y.dtype == x.dtype
    assert jnp.allclose(y, y_ref, atol=1e-6, rtol=1e-5)

    # Also exercise the ragged / padded path (size not a multiple of 1024).
    x2 = jax.random.normal(jax.random.PRNGKey(1), (3, 5, 7), dtype=jnp.float32)
    y2 = jax.block_until_ready(sigmoid_forward(x2))
    y2_ref = 1.0 / (1.0 + jnp.exp(-x2))
    assert y2.shape == x2.shape and y2.dtype == x2.dtype
    assert jnp.allclose(y2, y2_ref, atol=1e-6, rtol=1e-5)

    print("KERNEL_OK")
</pallas_src>

<mosaic_0001>
module attributes {stable_mosaic.version = 11 : i64} {
  func.func @_sigmoid_kernel(%arg0: i32, %arg1: memref<8x1024xf32, #tpu.memory_space<vmem>>, %arg2: memref<8x1024xf32, #tpu.memory_space<vmem>>) attributes {dimension_semantics = [#tpu.dimension_semantics<parallel>], iteration_bounds = array<i64: 1>, scalar_prefetch = 0 : i64, scratch_operands = 0 : i64, tpu.core_type = #tpu.core_type<tc>, window_params = [{transform_indices = @transform_0, window_bounds = array<i64: 8, 1024>}, {transform_indices = @transform_1, window_bounds = array<i64: 8, 1024>}]} {
    %c0 = arith.constant 0 : index
    %c0_0 = arith.constant 0 : index
    %0 = vector.load %arg1[%c0, %c0_0] : memref<8x1024xf32, #tpu.memory_space<vmem>>, vector<8x1024xf32>
    %cst = arith.constant 5.000000e-01 : f32
    %1 = vector.broadcast %cst : f32 to vector<8x1024xf32>
    %2 = arith.mulf %1, %0 : vector<8x1024xf32>
    %3 = math.tanh %2 : vector<8x1024xf32>
    %cst_1 = arith.constant 5.000000e-01 : f32
    %4 = vector.broadcast %cst_1 : f32 to vector<8x1024xf32>
    %5 = arith.mulf %4, %3 : vector<8x1024xf32>
    %cst_2 = arith.constant 5.000000e-01 : f32
    %6 = vector.broadcast %cst_2 : f32 to vector<8x1024xf32>
    %7 = arith.addf %5, %6 : vector<8x1024xf32>
    %c0_3 = arith.constant 0 : index
    %c0_4 = arith.constant 0 : index
    %8 = vector.load %arg2[%c0_3, %c0_4] : memref<8x1024xf32, #tpu.memory_space<vmem>>, vector<8x1024xf32>
    tpu.vector_store %arg2[%c0_3, %c0_4], %7 {strides = array<i32>} : memref<8x1024xf32, #tpu.memory_space<vmem>>, vector<8x1024xf32>,
    return
  }
  func.func @transform_0(%arg0: i32) -> (i32, i32) {
    %c0_i32 = arith.constant 0 : i32
    %c0_i32_0 = arith.constant 0 : i32
    return %arg0, %c0_i32 : i32, i32
  }
  func.func @transform_1(%arg0: i32) -> (i32, i32) {
    %c0_i32 = arith.constant 0 : i32
    %c0_i32_0 = arith.constant 0 : i32
    return %arg0, %c0_i32 : i32, i32
  }
}

</mosaic_0001>

<llo_original>
// kernel: tpu_custom_call.1
$region0: #{tpu_custom_call.1}
  #allocation0 [shape = 'u32[]', space=smem, size = 0x4, offset = 0x4, fixed_abs, tag = 'smem constant byte address 0x4 - core index']
  #allocation1 [shape = 'u32[144,128]{1,0:T(1,128)}', space=vmem, size = 0x12000, scoped, tag = 'internal scratch']
  %s0 = inlined_call_operand.hbm [shape: f32[2,1024], index: 0, kind: input, shape index: {}]
  %s1 = inlined_call_operand.hbm [shape: f32[2,1024], index: 1, kind: output, shape index: {}]
  %s2 = sld [smem:[#allocation0]]
  $region18: #{tpu_custom_call.1} parent=0
    _
  %s4 = ssub.s32 1, %s2
  %s5 = scalar_select 0, %s4, %s2
  $region1: #{tpu_custom_call.1} parent=0
    #allocation2 [shape = 'u8[32768]{0}', space=vmem, size = 0x8000, scoped, tag = 'input window, operand 0, single buffered']
    #allocation3 [shape = 's32[1]{0}', space=sflag, size = 0x4, scoped, tag = 'scoped memory for tpu_custom_call.1']
    #allocation4 [shape = 's32[1]{0}', space=sflag, size = 0x4, scoped, tag = 'scoped memory for tpu_custom_call.1']
    #allocation5 [shape = 'u8[32768]{0}', space=vmem, size = 0x8000, scoped, tag = 'output window, operand 0, single buffered']
    %6 = vsyncpa [#allocation3], 0
    %7 = vsyncpa [#allocation4], 0
    // Predicated region
    $region2: #{tpu_custom_call.1} parent=1 // pred_check
      _
    $region3: #{tpu_custom_call.1} parent=1 // pred_check_branch
      %9 = sbr.rel (0) target = $region5
    $region4: #{tpu_custom_call.1} parent=1 // pred_region
      %s11 = ssub.s32 1024, 256
      %12 = vsyncadd [#allocation3], %s11
      %s13 = sshll.u32 [#allocation2], 4
      %s14 = int_to_ptr.vmem [resolvable:$true] %s13
      %19 = dma.hbm_to_vmem [thread:$0]  %s0, 256, %s14, [#allocation3], 256, 256, 16
    $region5: #{tpu_custom_call.1} parent=1 // pred_fallthru
      _
    // Predicated region
    $region6: #{tpu_custom_call.1} parent=1 // pred_check
      _
    $region7: #{tpu_custom_call.1} parent=1 // pred_check_branch
      %21 = sbr.rel (0) target = $region9
    $region8: #{tpu_custom_call.1} parent=1 // pred_region
      %22 = dma.done [#allocation3], 1024
    $region9: #{tpu_custom_call.1} parent=1 // pred_fallthru
      _
    %v23 = vld [vmem:[#allocation2] sm:$0xff]
    %v24 = vld [vmem:[#allocation2 + $0x8] sm:$0xff]
    %v25 = vld [vmem:[#allocation2 + $0x10] sm:$0xff]
    %v26 = vld [vmem:[#allocation2 + $0x18] sm:$0xff]
    %v27 = vld [vmem:[#allocation2 + $0x20] sm:$0xff]
    %v28 = vld [vmem:[#allocation2 + $0x28] sm:$0xff]
    %v29 = vld [vmem:[#allocation2 + $0x30] sm:$0xff]
    %v30 = vld [vmem:[#allocation2 + $0x38] sm:$0xff]
    %v31 = vmul.f32 %v23, 0.5
    %v32 = vmul.f32 %v24, 0.5
    %v33 = vmul.f32 %v25, 0.5
    %v34 = vmul.f32 %v26, 0.5
    %v35 = vmul.f32 %v27, 0.5
    %v36 = vmul.f32 %v28, 0.5
    %v37 = vmul.f32 %v29, 0.5
    %v38 = vmul.f32 %v30, 0.5
    %v39 = vtanh.pop %v31
    %v40 = vtanh.pop %v32
    %v41 = vtanh.pop %v33
    %v42 = vtanh.pop %v34
    %v43 = vtanh.pop %v35
    %v44 = vtanh.pop %v36
    %v45 = vtanh.pop %v37
    %v46 = vtanh.pop %v38
    %v47 = vmul.f32 %v39, 0.5
    %v48 = vmul.f32 %v40, 0.5
    %v49 = vmul.f32 %v41, 0.5
    %v50 = vmul.f32 %v42, 0.5
    %v51 = vmul.f32 %v43, 0.5
    %v52 = vmul.f32 %v44, 0.5
    %v53 = vmul.f32 %v45, 0.5
    %v54 = vmul.f32 %v46, 0.5
    %v55 = vadd.f32 %v47, 0.5
    %v56 = vadd.f32 %v48, 0.5
    %v57 = vadd.f32 %v49, 0.5
    %v58 = vadd.f32 %v50, 0.5
    %v59 = vadd.f32 %v51, 0.5
    %v60 = vadd.f32 %v52, 0.5
    %v61 = vadd.f32 %v53, 0.5
    %v62 = vadd.f32 %v54, 0.5
    %63 = vst [vmem:[#allocation5] sm:$0xff] %v55
    %64 = vst [vmem:[#allocation5 + $0x8] sm:$0xff] %v56
    %65 = vst [vmem:[#allocation5 + $0x10] sm:$0xff] %v57
    %66 = vst [vmem:[#allocation5 + $0x18] sm:$0xff] %v58
    %67 = vst [vmem:[#allocation5 + $0x20] sm:$0xff] %v59
    %68 = vst [vmem:[#allocation5 + $0x28] sm:$0xff] %v60
    %69 = vst [vmem:[#allocation5 + $0x30] sm:$0xff] %v61
    %70 = vst [vmem:[#allocation5 + $0x38] sm:$0xff] %v62
    // Predicated region
    $region10: #{tpu_custom_call.1} parent=1 // pred_check
      _
    $region11: #{tpu_custom_call.1} parent=1 // pred_check_branch
      %72 = sbr.rel (0) target = $region13
    $region12: #{tpu_custom_call.1} parent=1 // pred_region
      %s74 = ssub.s32 1024, 256
      %75 = vsyncadd [#allocation4], %s74
      %s76 = sshll.u32 [#allocation5], 4
      %s77 = int_to_ptr.vmem [resolvable:$true] %s76
      %82 = dma.vmem_to_hbm [thread:$0]  %s77, 256, %s1, [#allocation4], 256, 256, 16
    $region13: #{tpu_custom_call.1} parent=1 // pred_fallthru
      _
    // Predicated region
    $region14: #{tpu_custom_call.1} parent=1 // pred_check
      _
    $region15: #{tpu_custom_call.1} parent=1 // pred_check_branch
      %84 = sbr.rel (0) target = $region17
    $region16: #{tpu_custom_call.1} parent=1 // pred_region
      %85 = dma.done [#allocation4], 1024
    $region17: #{tpu_custom_call.1} parent=1 // pred_fallthru
      _
    %86 = vsyncpa [#allocation3], 1
    %87 = vsyncpa [#allocation4], 1

</llo_original>
